<compile_context>
chip_gen: v5e
topology: v5e:2x2
jax: 0.10.0
libtpu: 0.0.40
codegen_flags: <defaults>
</compile_context>

<pallas_src>
import jax
import jax.numpy as jnp
from jax.experimental import pallas as pl
from jax.experimental.pallas import tpu as pltpu

HIDDEN = 64
LN_EPS = 1e-5


def _value_kernel(x_ref, w1_ref, w2_ref, c_ref, out_ref):
    # Packed constants (resident f32): rows = [b1, b2_folded, w3_row_folded, b3_folded]
    b1 = c_ref[0:1, :]          # (1, 64)
    b2 = c_ref[1:2, :]          # (1, 64)  (LayerNorm-1 affine folded in)
    w3 = c_ref[2:3, :]          # (1, 64)  (LayerNorm-2 gamma folded in)
    b3 = c_ref[3:4, 0:1]        # (1, 1)   (LayerNorm-2 beta folded in)

    # ---- Linear(D, 64) + Tanh (MXU + EUP) ----
    h = jnp.dot(x_ref[...], w1_ref[...], preferred_element_type=jnp.float32) + b1
    h = jnp.tanh(h)

    # ---- LayerNorm(64); affine folded into the next Linear ----
    mu = jnp.mean(h, axis=-1, keepdims=True)
    hc = h - mu
    h = hc * jax.lax.rsqrt(jnp.mean(hc * hc, axis=-1, keepdims=True) + LN_EPS)

    # ---- Linear(64, 64) (gamma1/beta1 pre-folded) + Tanh ----
    h = jnp.dot(h.astype(w2_ref.dtype), w2_ref[...],
                preferred_element_type=jnp.float32) + b2
    h = jnp.tanh(h)

    # ---- LayerNorm(64); affine folded into the final Linear ----
    mu = jnp.mean(h, axis=-1, keepdims=True)
    hc = h - mu
    h = hc * jax.lax.rsqrt(jnp.mean(hc * hc, axis=-1, keepdims=True) + LN_EPS)

    # ---- Linear(64, 1), lane-dense: (1,64) . (tb,64)^T -> (1, tb) ----
    out = jax.lax.dot_general(
        w3, h, (((1,), (1,)), ((), ())),
        preferred_element_type=jnp.float32) + b3
    out_ref[...] = out.astype(out_ref.dtype)


def _pick_batch_tile(B, D, elem_bytes):
    """Batch tile sized so the x tile is ~2 MiB; megacore & layout aware."""
    target_bytes = 2 * 1024 * 1024
    tb = max(128, min(target_bytes // (elem_bytes * max(D, 1)), 2048))
    # Keep >= 2 tiles for large batches so ("parallel",) uses both TCs on v7x.
    if B > 256 and tb >= B:
        tb = pl.cdiv(B, 2)
    if tb >= B:
        tb = -(-B // 16) * 16        # single tile: round for bf16 sublane packing
    else:
        tb = -(-tb // 128) * 128     # multi-tile: lane-dense (1, tb) out block needs 128 | tb
    return tb


def value_forward(state, params, *, use_bf16=True):
    """state: (B, state_dim) -> (B, 1)."""
    B, D = state.shape
    mm_dtype = jnp.bfloat16 if use_bf16 else jnp.float32

    # Fold LayerNorm affine params into the following Linear layers (tiny
    # one-time cost on (64,64)/(64,1) weights, outside the kernel):
    #   (n*g + beta) @ W + b  ==  n @ (g[:,None]*W) + (beta @ W + b)
    w2f = params["g1"].reshape(HIDDEN, 1) * params["w2"]                 # (64, 64)
    b2f = params["b2"] + params["beta1"] @ params["w2"]                  # (1, 64)
    w3f = (params["g2"].reshape(HIDDEN, 1) * params["w3"]).reshape(1, HIDDEN)
    b3f = params["b3"] + params["beta2"] @ params["w3"]                  # (1, 1)

    # Pack the tiny constant operands into one resident (4, 64) f32 array.
    consts = jnp.concatenate([
        params["b1"].reshape(1, HIDDEN).astype(jnp.float32),
        b2f.reshape(1, HIDDEN).astype(jnp.float32),
        w3f.astype(jnp.float32),
        jnp.broadcast_to(b3f.reshape(1, 1), (1, HIDDEN)).astype(jnp.float32),
    ], axis=0)

    x = state.astype(mm_dtype)
    w1 = params["w1"].astype(mm_dtype)
    w2 = w2f.astype(mm_dtype)

    tb = _pick_batch_tile(B, D, x.dtype.itemsize)
    n_tiles = pl.cdiv(B, tb)
    b_pad = n_tiles * tb
    if b_pad != B:
        x = jnp.pad(x, ((0, b_pad - B), (0, 0)))   # zero rows, sliced off below

    out = pl.pallas_call(
        _value_kernel,
        out_shape=jax.ShapeDtypeStruct((1, b_pad), jnp.float32),
        grid=(n_tiles,),
        in_specs=[
            pl.BlockSpec((tb, D), lambda i: (i, 0)),              # x tile (pipelined)
            pl.BlockSpec((D, HIDDEN), lambda i: (0, 0)),          # w1 (resident)
            pl.BlockSpec((HIDDEN, HIDDEN), lambda i: (0, 0)),     # w2 folded (resident)
            pl.BlockSpec((4, HIDDEN), lambda i: (0, 0)),          # packed consts (resident)
        ],
        out_specs=pl.BlockSpec((1, tb), lambda i: (0, i)),        # lane-dense out row
        compiler_params=pltpu.CompilerParams(
            dimension_semantics=("parallel",),          # megacore sharding on v7x
            vmem_limit_bytes=32 * 1024 * 1024,
        ),
    )(x, w1, w2, consts)

    return out[0, :B].reshape(B, 1)


def init_params(key, state_dim):
    """Synthetic init matching the PyTorch module's shapes.

    PyTorch Linear stores weight as (out, in); we keep (in, out) so the kernel
    does x @ W directly.  LayerNorm gamma/beta get non-trivial values to
    exercise the affine-folding path (PyTorch default is ones/zeros).
    """
    ks = jax.random.split(key, 7)

    def lin(k, fan_in, fan_out):
        kw, kb = jax.random.split(k)
        bound = 1.0 / jnp.sqrt(fan_in)
        w = jax.random.uniform(kw, (fan_in, fan_out), jnp.float32, -bound, bound)
        b = jax.random.uniform(kb, (1, fan_out), jnp.float32, -bound, bound)
        return w, b

    w1, b1 = lin(ks[0], state_dim, HIDDEN)
    w2, b2 = lin(ks[1], HIDDEN, HIDDEN)
    w3, b3 = lin(ks[2], HIDDEN, 1)
    return {
        "w1": w1, "b1": b1,
        "g1": jax.random.uniform(ks[3], (1, HIDDEN), jnp.float32, 0.9, 1.1),
        "beta1": jax.random.uniform(ks[4], (1, HIDDEN), jnp.float32, -0.1, 0.1),
        "w2": w2, "b2": b2,
        "g2": jax.random.uniform(ks[5], (1, HIDDEN), jnp.float32, 0.9, 1.1),
        "beta2": jax.random.uniform(ks[6], (1, HIDDEN), jnp.float32, -0.1, 0.1),
        "w3": w3, "b3": b3,
    }


def _reference(state, p):
    """Pure-JAX reference of the un-folded PyTorch forward."""
    x = state.astype(jnp.float32)
    h = jnp.tanh(x @ p["w1"] + p["b1"])
    mu = h.mean(-1, keepdims=True)
    var = ((h - mu) ** 2).mean(-1, keepdims=True)
    h = (h - mu) / jnp.sqrt(var + LN_EPS) * p["g1"] + p["beta1"]
    h = jnp.tanh(h @ p["w2"] + p["b2"])
    mu = h.mean(-1, keepdims=True)
    var = ((h - mu) ** 2).mean(-1, keepdims=True)
    h = (h - mu) / jnp.sqrt(var + LN_EPS) * p["g2"] + p["beta2"]
    return h @ p["w3"] + p["b3"]


if __name__ == "__main__":
    key = jax.random.PRNGKey(0)
    k_state, k_params = jax.random.split(key)

    batch = 8
    state_dim = 16

    state = jax.random.normal(k_state, (batch, state_dim), jnp.float32)
    params = init_params(k_params, state_dim)

    v_ref = _reference(state, params)

    # Exact-semantics path (f32 operands): tight tolerance.
    v_f32 = jax.jit(lambda s, p: value_forward(s, p, use_bf16=False))(state, params)
    v_f32 = jax.block_until_ready(v_f32)
    assert v_f32.shape == (batch, 1)
    assert jnp.allclose(v_f32, v_ref, atol=1e-4, rtol=1e-4)

    # Performance path (bf16 matmul operands, f32 accumulation): loose tolerance.
    v_bf16 = jax.jit(value_forward)(state, params)
    v_bf16 = jax.block_until_ready(v_bf16)
    assert v_bf16.shape == (batch, 1)
    assert jnp.allclose(v_bf16, v_ref, atol=5e-2, rtol=5e-2)

    print("KERNEL_OK")
</pallas_src>

<mosaic_0001>
module attributes {stable_mosaic.version = 11 : i64} {
  func.func @_value_kernel(%arg0: i32, %arg1: memref<16x16xf32, #tpu.memory_space<vmem>>, %arg2: memref<16x64xf32, #tpu.memory_space<vmem>>, %arg3: memref<64x64xf32, #tpu.memory_space<vmem>>, %arg4: memref<4x64xf32, #tpu.memory_space<vmem>>, %arg5: memref<1x16xf32, #tpu.memory_space<vmem>>) attributes {dimension_semantics = [#tpu.dimension_semantics<parallel>], iteration_bounds = array<i64: 1>, scalar_prefetch = 0 : i64, scratch_operands = 0 : i64, tpu.core_type = #tpu.core_type<tc>, window_params = [{transform_indices = @transform_0, window_bounds = array<i64: 16, 16>}, {pipeline_mode = #tpu.pipeline_mode<synchronous>, transform_indices = @transform_1, window_bounds = array<i64: 16, 64>}, {pipeline_mode = #tpu.pipeline_mode<synchronous>, transform_indices = @transform_2, window_bounds = array<i64: 64, 64>}, {pipeline_mode = #tpu.pipeline_mode<synchronous>, transform_indices = @transform_3, window_bounds = array<i64: 4, 64>}, {transform_indices = @transform_4, window_bounds = array<i64: 1, 16>}]} {
    %c0 = arith.constant 0 : index
    %c0_0 = arith.constant 0 : index
    %0 = vector.load %arg4[%c0, %c0_0] : memref<4x64xf32, #tpu.memory_space<vmem>>, vector<1x64xf32>
    %c1 = arith.constant 1 : index
    %c0_1 = arith.constant 0 : index
    %1 = vector.load %arg4[%c1, %c0_1] : memref<4x64xf32, #tpu.memory_space<vmem>>, vector<1x64xf32>
    %c2 = arith.constant 2 : index
    %c0_2 = arith.constant 0 : index
    %2 = vector.load %arg4[%c2, %c0_2] : memref<4x64xf32, #tpu.memory_space<vmem>>, vector<1x64xf32>
    %c3 = arith.constant 3 : index
    %c0_3 = arith.constant 0 : index
    %3 = vector.load %arg4[%c3, %c0_3] : memref<4x64xf32, #tpu.memory_space<vmem>>, vector<1x1xf32>
    %c0_4 = arith.constant 0 : index
    %c0_5 = arith.constant 0 : index
    %4 = vector.load %arg1[%c0_4, %c0_5] : memref<16x16xf32, #tpu.memory_space<vmem>>, vector<16x16xf32>
    %c0_6 = arith.constant 0 : index
    %c0_7 = arith.constant 0 : index
    %5 = vector.load %arg2[%c0_6, %c0_7] : memref<16x64xf32, #tpu.memory_space<vmem>>, vector<16x64xf32>
    %cst = arith.constant dense<0.000000e+00> : vector<16x64xf32>
    %6 = tpu.matmul %4, %5, %cst {dimension_numbers = #tpu.dot_dimension_numbers<[1], [0], [0], [1], [0, 0, 1, 1], [], []>} : vector<16x16xf32>, vector<16x64xf32>, vector<16x64xf32> -> vector<16x64xf32>
    %7 = vector.broadcast %0 : vector<1x64xf32> to vector<16x64xf32>
    %8 = arith.addf %6, %7 : vector<16x64xf32>
    %9 = math.tanh %8 : vector<16x64xf32>
    %cst_8 = arith.constant dense<0.000000e+00> : vector<16xf32>
    %10 = vector.multi_reduction <add>, %9, %cst_8 [1] : vector<16x64xf32> to vector<16xf32>
    %11 = vector.shape_cast %10 : vector<16xf32> to vector<16x1xf32>
    %cst_9 = arith.constant 6.400000e+01 : f32
    %12 = vector.broadcast %cst_9 : f32 to vector<16x1xf32>
    %13 = arith.divf %11, %12 : vector<16x1xf32>
    %14 = vector.broadcast %13 : vector<16x1xf32> to vector<16x64xf32>
    %15 = arith.subf %9, %14 : vector<16x64xf32>
    %16 = arith.mulf %15, %15 : vector<16x64xf32>
    %cst_10 = arith.constant dense<0.000000e+00> : vector<16xf32>
    %17 = vector.multi_reduction <add>, %16, %cst_10 [1] : vector<16x64xf32> to vector<16xf32>
    %18 = vector.shape_cast %17 : vector<16xf32> to vector<16x1xf32>
    %cst_11 = arith.constant 6.400000e+01 : f32
    %19 = vector.broadcast %cst_11 : f32 to vector<16x1xf32>
    %20 = arith.divf %18, %19 : vector<16x1xf32>
    %cst_12 = arith.constant 9.99999974E-6 : f32
    %21 = vector.broadcast %cst_12 : f32 to vector<16x1xf32>
    %22 = arith.addf %20, %21 : vector<16x1xf32>
    %23 = math.rsqrt %22 : vector<16x1xf32>
    %24 = vector.broadcast %23 : vector<16x1xf32> to vector<16x64xf32>
    %25 = arith.mulf %15, %24 : vector<16x64xf32>
    %c0_13 = arith.constant 0 : index
    %c0_14 = arith.constant 0 : index
    %26 = vector.load %arg3[%c0_13, %c0_14] : memref<64x64xf32, #tpu.memory_space<vmem>>, vector<64x64xf32>
    %cst_15 = arith.constant dense<0.000000e+00> : vector<16x64xf32>
    %27 = tpu.matmul %25, %26, %cst_15 {dimension_numbers = #tpu.dot_dimension_numbers<[1], [0], [0], [1], [0, 0, 1, 1], [], []>} : vector<16x64xf32>, vector<64x64xf32>, vector<16x64xf32> -> vector<16x64xf32>
    %28 = vector.broadcast %1 : vector<1x64xf32> to vector<16x64xf32>
    %29 = arith.addf %27, %28 : vector<16x64xf32>
    %30 = math.tanh %29 : vector<16x64xf32>
    %cst_16 = arith.constant dense<0.000000e+00> : vector<16xf32>
    %31 = vector.multi_reduction <add>, %30, %cst_16 [1] : vector<16x64xf32> to vector<16xf32>
    %32 = vector.shape_cast %31 : vector<16xf32> to vector<16x1xf32>
    %cst_17 = arith.constant 6.400000e+01 : f32
    %33 = vector.broadcast %cst_17 : f32 to vector<16x1xf32>
    %34 = arith.divf %32, %33 : vector<16x1xf32>
    %35 = vector.broadcast %34 : vector<16x1xf32> to vector<16x64xf32>
    %36 = arith.subf %30, %35 : vector<16x64xf32>
    %37 = arith.mulf %36, %36 : vector<16x64xf32>
    %cst_18 = arith.constant dense<0.000000e+00> : vector<16xf32>
    %38 = vector.multi_reduction <add>, %37, %cst_18 [1] : vector<16x64xf32> to vector<16xf32>
    %39 = vector.shape_cast %38 : vector<16xf32> to vector<16x1xf32>
    %cst_19 = arith.constant 6.400000e+01 : f32
    %40 = vector.broadcast %cst_19 : f32 to vector<16x1xf32>
    %41 = arith.divf %39, %40 : vector<16x1xf32>
    %cst_20 = arith.constant 9.99999974E-6 : f32
    %42 = vector.broadcast %cst_20 : f32 to vector<16x1xf32>
    %43 = arith.addf %41, %42 : vector<16x1xf32>
    %44 = math.rsqrt %43 : vector<16x1xf32>
    %45 = vector.broadcast %44 : vector<16x1xf32> to vector<16x64xf32>
    %46 = arith.mulf %36, %45 : vector<16x64xf32>
    %cst_21 = arith.constant dense<0.000000e+00> : vector<1x16xf32>
    %47 = tpu.matmul %2, %46, %cst_21 {dimension_numbers = #tpu.dot_dimension_numbers<[1], [1], [0], [0], [0, 0, 1, 0], [], []>} : vector<1x64xf32>, vector<16x64xf32>, vector<1x16xf32> -> vector<1x16xf32>
    %48 = vector.broadcast %3 : vector<1x1xf32> to vector<1x16xf32>
    %49 = arith.addf %47, %48 : vector<1x16xf32>
    %c0_22 = arith.constant 0 : index
    %c0_23 = arith.constant 0 : index
    %50 = vector.load %arg5[%c0_22, %c0_23] : memref<1x16xf32, #tpu.memory_space<vmem>>, vector<1x16xf32>
    tpu.vector_store %arg5[%c0_22, %c0_23], %49 {strides = array<i32>} : memref<1x16xf32, #tpu.memory_space<vmem>>, vector<1x16xf32>,
    return
  }
  func.func @transform_0(%arg0: i32) -> (i32, i32) {
    %c0_i32 = arith.constant 0 : i32
    %c0_i32_0 = arith.constant 0 : i32
    return %arg0, %c0_i32 : i32, i32
  }
  func.func @transform_1(%arg0: i32) -> (i32, i32) {
    %c0_i32 = arith.constant 0 : i32
    %c0_i32_0 = arith.constant 0 : i32
    %c0_i32_1 = arith.constant 0 : i32
    return %c0_i32, %c0_i32_0 : i32, i32
  }
  func.func @transform_2(%arg0: i32) -> (i32, i32) {
    %c0_i32 = arith.constant 0 : i32
    %c0_i32_0 = arith.constant 0 : i32
    %c0_i32_1 = arith.constant 0 : i32
    return %c0_i32, %c0_i32_0 : i32, i32
  }
  func.func @transform_3(%arg0: i32) -> (i32, i32) {
    %c0_i32 = arith.constant 0 : i32
    %c0_i32_0 = arith.constant 0 : i32
    %c0_i32_1 = arith.constant 0 : i32
    return %c0_i32, %c0_i32_0 : i32, i32
  }
  func.func @transform_4(%arg0: i32) -> (i32, i32) {
    %c0_i32 = arith.constant 0 : i32
    %c0_i32_0 = arith.constant 0 : i32
    return %c0_i32, %arg0 : i32, i32
  }
}

</mosaic_0001>

<llo_original>
// kernel: _lambda_.1
$region0: #{_lambda_.1}
  #allocation0 [shape = 'u32[]', space=smem, size = 0x4, offset = 0x4, fixed_abs, tag = 'smem constant byte address 0x4 - core index']
  #allocation1 [shape = 'u32[72,128]{1,0:T(1,128)}', space=vmem, size = 0x9000, scoped, tag = 'internal scratch']
  %s0 = inlined_call_operand.vmem [shape: f32[16,16], index: 0, kind: input, shape index: {}]
  %s1 = inlined_call_operand.vmem [shape: f32[16,64], index: 1, kind: input, shape index: {}]
  %s2 = inlined_call_operand.vmem [shape: f32[64,64], index: 2, kind: input, shape index: {}]
  %s3 = inlined_call_operand.vmem [shape: f32[4,64], index: 3, kind: input, shape index: {}]
  %s4 = inlined_call_operand.vmem [shape: f32[1,16], index: 4, kind: output, shape index: {}]
  %s5 = sld [smem:[#allocation0]]
  $region26: #{_lambda_.1} parent=0
    _
  %s7 = ssub.s32 1, %s5
  %s8 = scalar_select 0, %s7, %s5
  // Predicated region
  $region2: #{_lambda_.1} parent=0 // pred_check
    _
  $region3: #{_lambda_.1} parent=0 // pred_check_branch
    %10 = sbr.rel (0) target = $region5
  $region4: #{_lambda_.1} parent=0 // pred_region
    _
  $region5: #{_lambda_.1} parent=0 // pred_fallthru
    _
  // Predicated region
  $region6: #{_lambda_.1} parent=0 // pred_check
    _
  $region7: #{_lambda_.1} parent=0 // pred_check_branch
    %12 = sbr.rel (0) target = $region9
  $region8: #{_lambda_.1} parent=0 // pred_region
    _
  $region9: #{_lambda_.1} parent=0 // pred_fallthru
    _
  // Predicated region
  $region10: #{_lambda_.1} parent=0 // pred_check
    _
  $region11: #{_lambda_.1} parent=0 // pred_check_branch
    %14 = sbr.rel (0) target = $region13
  $region12: #{_lambda_.1} parent=0 // pred_region
    _
  $region13: #{_lambda_.1} parent=0 // pred_fallthru
    _
  // Predicated region
  $region14: #{_lambda_.1} parent=0 // pred_check
    _
  $region15: #{_lambda_.1} parent=0 // pred_check_branch
    %16 = sbr.rel (0) target = $region17
  $region16: #{_lambda_.1} parent=0 // pred_region
    _
  $region17: #{_lambda_.1} parent=0 // pred_fallthru
    _
  %v17 = vld [vmem:[%s3] sm:$0x1]
  %v18 = vld [vmem:[%s3 + $0x1] sm:$0x1]
  %v19 = vld [vmem:[%s3 + $0x2] sm:$0x1]
  %v20 = vld [vmem:[%s3 + $0x3] sm:$0x1]
  %v21 = vld [vmem:[%s0] sm:$0xff]
  %v22 = vld [vmem:[%s0 + $0x8] sm:$0xff]
  %v23 = vld [vmem:[%s1] sm:$0xff]
  %v24 = vld [vmem:[%s1 + $0x8] sm:$0xff]
  %v25 = vperm.slane %v17, 0
  %vm26 = vcmask 130048
  %v28 = vsel %vm26, %v21, 0
  %v31 = vsel %vm26, %v22, 0
  %33 = vmatpush.msra.mxu0 0.0
  %34 = vmatpush.msra.mxu0 0.0
  %35 = vmatpush.msra.mxu0 0.0
  %36 = vmatpush.msra.mxu0 0.0
  %37 = vmatpush.msra.mxu0 0.0
  %38 = vmatpush.msra.mxu0 0.0
  %39 = vmatpush.msra.mxu0 0.0
  %40 = vmatpush.msra.mxu0 0.0
  %41 = vmatpush.msra.mxu0 0.0
  %42 = vmatpush.msra.mxu0 0.0
  %43 = vmatpush.msra.mxu0 0.0
  %44 = vmatpush.msra.mxu0 0.0
  %45 = vmatpush.msra.mxu0 0.0
  %46 = vmatpush.msra.mxu0 0.0
  %47 = vmatpush.msra.mxu0 %v24
  %48 = vmatpush.msra.mxu0 %v23
  %49 = vmatmul.f32.gmra.mxu0 %v28
  %v50 = vpop.f32.mrf.mxu0
  %v51 = vadd.f32 %v25, %v50
  %52 = vmatmul.f32.gmra.mxu0 %v31
  %v53 = vpop.f32.mrf.mxu0
  %v54 = vadd.f32 %v25, %v53
  %55 = vdwg.mxu0
  %v56 = vtanh.pop %v51
  %v57 = vtanh.pop %v54
  %vm58 = vcmask 523264
  %v59 = vsel %vm58, %v56, 0.0
  %60 = vadd.xlane.f32.xlu0 %v59
  %v61 = vpop.xlane.xlu0 %60
  %v62 = vsel %vm58, %v57, 0.0
  %63 = vadd.xlane.f32.xlu0 %v62
  %v64 = vpop.xlane.xlu0 %63
  %v65 = vrcp.pop 64.0
  %v66 = vmul.f32 64.0, %v65
  %v67 = vsub.f32 1.0, %v66
  %v68 = vmul.f32 %v65, %v67
  %v69 = vadd.f32 %v65, %v68
  %vm70 = vweird.f32 %v65
  %v71 = vsel %vm70, %v65, %v69
  %v72 = vmul.f32 %v61, %v71
  %v73 = vmul.f32 %v64, %v71
  %v74 = vsub.f32 %v56, %v72
  %v75 = vsub.f32 %v57, %v73
  %v76 = vmul.f32 %v74, %v74
  %v77 = vmul.f32 %v75, %v75
  %v78 = vsel %vm58, %v76, 0.0
  %79 = vadd.xlane.f32.xlu0 %v78
  %v80 = vpop.xlane.xlu0 %79
  %v81 = vsel %vm58, %v77, 0.0
  %82 = vadd.xlane.f32.xlu0 %v81
  %v83 = vpop.xlane.xlu0 %82
  %v84 = vmul.f32 %v80, %v71
  %v85 = vmul.f32 %v83, %v71
  %v86 = vadd.f32 %v84, 1e-05
  %v87 = vadd.f32 %v85, 1e-05
  %v88 = vrsqrt.pop %v86
  %v89 = vmul.f32 %v88, %v86
  %v90 = vmul.f32 %v89, %v88
  %v91 = vmul.f32 0.5, %v90
  %v92 = vsub.f32 1.5, %v91
  %v93 = vmul.f32 %v88, %v92
  %vm94 = vweird.f32 %v86
  %vm95 = vweird.f32 %v88
  %vm96 = vmor %vm94, %vm95
  %v97 = vsel %vm96, %v88, %v93
  %v98 = vrsqrt.pop %v87
  %v99 = vmul.f32 %v98, %v87
  %v100 = vmul.f32 %v99, %v98
  %v101 = vmul.f32 0.5, %v100
  %v102 = vsub.f32 1.5, %v101
  %v103 = vmul.f32 %v98, %v102
  %vm104 = vweird.f32 %v87
  %vm105 = vweird.f32 %v98
  %vm106 = vmor %vm104, %vm105
  %v107 = vsel %vm106, %v98, %v103
  %v108 = vmul.f32 %v74, %v97
  %v109 = vmul.f32 %v75, %v107
  %v110 = vld [vmem:[%s2] sm:$0xff]
  %v111 = vld [vmem:[%s2 + $0x8] sm:$0xff]
  %v112 = vld [vmem:[%s2 + $0x10] sm:$0xff]
  %v113 = vld [vmem:[%s2 + $0x18] sm:$0xff]
  %v114 = vld [vmem:[%s2 + $0x20] sm:$0xff]
  %v115 = vld [vmem:[%s2 + $0x28] sm:$0xff]
  %v116 = vld [vmem:[%s2 + $0x30] sm:$0xff]
  %v117 = vld [vmem:[%s2 + $0x38] sm:$0xff]
  %v118 = vperm.slane %v18, 0
  %v120 = vsel %vm58, %v108, 0
  %v123 = vsel %vm58, %v109, 0
  %125 = vmatpush.msra.mxu0 0.0
  %126 = vmatpush.msra.mxu0 0.0
  %127 = vmatpush.msra.mxu0 0.0
  %128 = vmatpush.msra.mxu0 0.0
  %129 = vmatpush.msra.mxu0 0.0
  %130 = vmatpush.msra.mxu0 0.0
  %131 = vmatpush.msra.mxu0 0.0
  %132 = vmatpush.msra.mxu0 0.0
  %133 = vmatpush.msra.mxu0 %v117
  %134 = vmatpush.msra.mxu0 %v116
  %135 = vmatpush.msra.mxu0 %v115
  %136 = vmatpush.msra.mxu0 %v114
  %137 = vmatpush.msra.mxu0 %v113
  %138 = vmatpush.msra.mxu0 %v112
  %139 = vmatpush.msra.mxu0 %v111
  %140 = vmatpush.msra.mxu0 %v110
  %141 = vmatmul.f32.gmra.mxu0 %v120
  %v142 = vpop.f32.mrf.mxu0
  %v143 = vadd.f32 %v118, %v142
  %144 = vmatmul.f32.gmra.mxu0 %v123
  %v145 = vpop.f32.mrf.mxu0
  %v146 = vadd.f32 %v118, %v145
  %147 = vdwg.mxu0
  %v148 = vtanh.pop %v143
  %v149 = vtanh.pop %v146
  %v150 = vsel %vm58, %v148, 0.0
  %151 = vadd.xlane.f32.xlu0 %v150
  %v152 = vpop.xlane.xlu0 %151
  %v153 = vsel %vm58, %v149, 0.0
  %154 = vadd.xlane.f32.xlu0 %v153
  %v155 = vpop.xlane.xlu0 %154
  %v156 = vmul.f32 %v152, %v71
  %v157 = vmul.f32 %v155, %v71
  %v158 = vsub.f32 %v148, %v156
  %v159 = vsub.f32 %v149, %v157
  %v160 = vmul.f32 %v158, %v158
  %v161 = vmul.f32 %v159, %v159
  %v162 = vsel %vm58, %v160, 0.0
  %163 = vadd.xlane.f32.xlu0 %v162
  %v164 = vpop.xlane.xlu0 %163
  %v165 = vsel %vm58, %v161, 0.0
  %166 = vadd.xlane.f32.xlu0 %v165
  %v167 = vpop.xlane.xlu0 %166
  %v168 = vmul.f32 %v164, %v71
  %v169 = vmul.f32 %v167, %v71
  %v170 = vadd.f32 %v168, 1e-05
  %v171 = vadd.f32 %v169, 1e-05
  %v172 = vrsqrt.pop %v170
  %v173 = vmul.f32 %v172, %v170
  %v174 = vmul.f32 %v173, %v172
  %v175 = vmul.f32 0.5, %v174
  %v176 = vsub.f32 1.5, %v175
  %v177 = vmul.f32 %v172, %v176
  %vm178 = vweird.f32 %v170
  %vm179 = vweird.f32 %v172
  %vm180 = vmor %vm178, %vm179
  %v181 = vsel %vm180, %v172, %v177
  %v182 = vrsqrt.pop %v171
  %v183 = vmul.f32 %v182, %v171
  %v184 = vmul.f32 %v183, %v182
  %v185 = vmul.f32 0.5, %v184
  %v186 = vsub.f32 1.5, %v185
  %v187 = vmul.f32 %v182, %v186
  %vm188 = vweird.f32 %v171
  %vm189 = vweird.f32 %v182
  %vm190 = vmor %vm188, %vm189
  %v191 = vsel %vm190, %v182, %v187
  %v192 = vmul.f32 %v158, %v181
  %v193 = vmul.f32 %v159, %v191
  %195 = vset.pattern.permute.xlu0 0
  %196 = vperm.xlu0 %195, %v20
  %v197 = vpop.permute.xlu0 %196
  %v200 = vsel %vm58, %v19, 0
  %v203 = vsel %vm58, %v192, 0
  %v206 = vsel %vm58, %v193, 0
  %208 = vmatpush.xpose.msra.mxu0 0.0
  %209 = vmatpush.xpose.msra.mxu0 0.0
  %210 = vmatpush.xpose.msra.mxu0 0.0
  %211 = vmatpush.xpose.msra.mxu0 0.0
  %212 = vmatpush.xpose.msra.mxu0 0.0
  %213 = vmatpush.xpose.msra.mxu0 0.0
  %214 = vmatpush.xpose.msra.mxu0 0.0
  %215 = vmatpush.xpose.msra.mxu0 0.0
  %216 = vmatpush.xpose.msra.mxu0 0.0
  %217 = vmatpush.xpose.msra.mxu0 0.0
  %218 = vmatpush.xpose.msra.mxu0 0.0
  %219 = vmatpush.xpose.msra.mxu0 0.0
  %220 = vmatpush.xpose.msra.mxu0 0.0
  %221 = vmatpush.xpose.msra.mxu0 0.0
  %222 = vmatpush.xpose.msra.mxu0 %v206
  %223 = vmatpush.xpose.msra.mxu0 %v203
  %224 = vmatmul.f32.gmra.mxu0 %v200
  %v225 = vpop.f32.mrf.mxu0
  %v226 = vadd.f32 %v197, %v225
  %227 = vdwg.mxu0
  %vm228 = vcmask 122880
  %229 = vst.msk [vmem:[%s4] sm:$0x1] %vm228, %v226
  // Predicated region
  $region18: #{_lambda_.1} parent=0 // pred_check
    _
  $region19: #{_lambda_.1} parent=0 // pred_check_branch
    %231 = sbr.rel (0) target = $region21
  $region20: #{_lambda_.1} parent=0 // pred_region
    _
  $region21: #{_lambda_.1} parent=0 // pred_fallthru
    _
  // Predicated region
  $region22: #{_lambda_.1} parent=0 // pred_check
    _
  $region23: #{_lambda_.1} parent=0 // pred_check_branch
    %233 = sbr.rel (0) target = $region25
  $region24: #{_lambda_.1} parent=0 // pred_region
    _
  $region25: #{_lambda_.1} parent=0 // pred_fallthru
    _

</llo_original>
